<compile_context>
chip_gen: v7x
topology: tpu7x:2x2x1
jax: 0.10.0
libtpu: 0.0.40
codegen_flags: <defaults>
</compile_context>

<pallas_src>
import math

import jax
import jax.numpy as jnp
from jax.experimental import pallas as pl
from jax.experimental.pallas import tpu as pltpu

# ---------------- problem sizes (small, deterministic) ----------------
B = 2                          # batch
N_BOX = 8                      # number of boxes
N_EMS = 8                      # number of empty maximal spaces
BOX_DIM = 6                    # box state features
CORNER_NUM = 2                 # corners per EMS
EMS_DIM = 3 * CORNER_NUM       # 6: xyz per corner
HIDDEN = 32

OBJ_IN = BOX_DIM + N_BOX       # 14: box state ++ precedence row
ROWS_BOX = B * N_BOX           # 16
ROWS_EMS = B * N_EMS           # 16
ROWS = ROWS_BOX + ROWS_EMS     # 32


# ---------------- Pallas kernel: both encoders, one output ref ----------------
def encoder_kernel(box_ref, prec_ref, ems_ref, w_obj_ref, w_sp_ref, out_ref):
    # box_ref  : (ROWS_BOX, BOX_DIM)
    # prec_ref : (ROWS_BOX, N_BOX)
    # ems_ref  : (ROWS_EMS, EMS_DIM)
    # w_obj_ref: (OBJ_IN + 1, HIDDEN)  rows = [W_prec (8) ; W_box (6) ; b_obj (1)]
    # w_sp_ref : (EMS_DIM + 1, HIDDEN) rows = [W_sp (6) ; b_sp (1)]
    # out_ref  : (ROWS, HIDDEN)        rows = [object rows ; space rows]

    obj_h = (
        jnp.dot(prec_ref[...], w_obj_ref[0:N_BOX, :],
                preferred_element_type=jnp.float32)
        + jnp.dot(box_ref[...], w_obj_ref[N_BOX:OBJ_IN, :],
                  preferred_element_type=jnp.float32)
        + w_obj_ref[OBJ_IN:OBJ_IN + 1, :]                  # bias row (broadcast)
    )
    ems_h = (
        jnp.dot(ems_ref[...], w_sp_ref[0:EMS_DIM, :],
                preferred_element_type=jnp.float32)
        + w_sp_ref[EMS_DIM:EMS_DIM + 1, :]                 # bias row (broadcast)
    )

    out_ref[0:ROWS_BOX, :] = jnp.maximum(obj_h, 0.0)       # ReLU (VPU)
    out_ref[ROWS_BOX:ROWS, :] = jnp.maximum(ems_h, 0.0)


# ---------------- wrapper (only free reshapes + pallas_call) ----------------
@jax.jit
def encoder_forward(box, precedences, ems, packed_params):
    w_obj_aug, w_sp_aug = packed_params

    # contiguous reshapes only (no concat / pad / HBM round trip)
    box2d = box.reshape(ROWS_BOX, BOX_DIM)
    prec2d = precedences.reshape(ROWS_BOX, N_BOX)
    ems2d = ems.reshape(ROWS_EMS, EMS_DIM)

    vmem = pl.BlockSpec(memory_space=pltpu.MemorySpace.VMEM)
    out = pl.pallas_call(
        encoder_kernel,
        out_shape=jax.ShapeDtypeStruct((ROWS, HIDDEN), jnp.float32),
        in_specs=[vmem, vmem, vmem, vmem, vmem],
        out_specs=vmem,
    )(box2d, prec2d, ems2d, w_obj_aug, w_sp_aug)

    box_vecs = out[:ROWS_BOX].reshape(B, N_BOX, HIDDEN)
    ems_vecs = out[ROWS_BOX:].reshape(B, N_EMS, HIDDEN)
    return box_vecs, ems_vecs


# ---------------- deterministic parameter construction / packing ----------------
def init_params(key):
    ks = jax.random.split(key, 4)

    def lin(k, fan_in, shape):
        bound = 1.0 / math.sqrt(fan_in)
        return jax.random.uniform(k, shape, jnp.float32, -bound, bound)

    w_obj = lin(ks[0], OBJ_IN, (OBJ_IN, HIDDEN))   # rows 0:BOX_DIM -> box feats
    b_obj = lin(ks[1], OBJ_IN, (1, HIDDEN))
    w_sp = lin(ks[2], EMS_DIM, (EMS_DIM, HIDDEN))
    b_sp = lin(ks[3], EMS_DIM, (1, HIDDEN))

    w_box = w_obj[:BOX_DIM]                        # (6, H)
    w_prec = w_obj[BOX_DIM:]                       # (8, H)

    # pack once: [W_prec ; W_box ; b_obj]  and  [W_sp ; b_sp]
    # (precedence block first so all in-kernel row slices start sublane-aligned)
    w_obj_aug = jnp.concatenate([w_prec, w_box, b_obj], axis=0)    # (15, H)
    w_sp_aug = jnp.concatenate([w_sp, b_sp], axis=0)               # (7, H)

    raw = (w_obj, b_obj, w_sp, b_sp)
    packed = (w_obj_aug, w_sp_aug)
    return packed, raw


# ---------------- pure-JAX reference (correctness check) ----------------
def encoder_reference(box, precedences, ems, raw_params):
    w_obj, b_obj, w_sp, b_sp = raw_params
    obj_in = jnp.concatenate([box, precedences], axis=-1)          # (B, N_BOX, OBJ_IN)
    box_vecs = jax.nn.relu(jnp.einsum("bnd,dh->bnh", obj_in, w_obj) + b_obj)
    ems_vecs = jax.nn.relu(jnp.einsum("bnd,dh->bnh", ems, w_sp) + b_sp)
    return box_vecs, ems_vecs


if __name__ == "__main__":
    key = jax.random.PRNGKey(0)
    kp, kb, kprec, ke = jax.random.split(key, 4)

    packed_params, raw_params = init_params(kp)

    box = jax.random.normal(kb, (B, N_BOX, BOX_DIM), jnp.float32)
    precedences = (jax.random.uniform(kprec, (B, N_BOX, N_BOX)) > 0.5).astype(jnp.float32)
    ems = jax.random.normal(ke, (B, N_EMS, EMS_DIM), jnp.float32)

    box_vecs, ems_vecs = encoder_forward(box, precedences, ems, packed_params)
    jax.block_until_ready((box_vecs, ems_vecs))

    assert box_vecs.shape == (B, N_BOX, HIDDEN)
    assert ems_vecs.shape == (B, N_EMS, HIDDEN)

    ref_box, ref_ems = encoder_reference(box, precedences, ems, raw_params)
    assert jnp.allclose(box_vecs, ref_box, atol=1e-5, rtol=1e-5)
    assert jnp.allclose(ems_vecs, ref_ems, atol=1e-5, rtol=1e-5)

    print("KERNEL_OK")
</pallas_src>

<mosaic_0001>
module attributes {stable_mosaic.version = 11 : i64} {
  func.func @encoder_kernel(%arg0: memref<16x6xf32, #tpu.memory_space<vmem>>, %arg1: memref<16x8xf32, #tpu.memory_space<vmem>>, %arg2: memref<16x6xf32, #tpu.memory_space<vmem>>, %arg3: memref<15x32xf32, #tpu.memory_space<vmem>>, %arg4: memref<7x32xf32, #tpu.memory_space<vmem>>, %arg5: memref<32x32xf32, #tpu.memory_space<vmem>>) attributes {dimension_semantics = [], scalar_prefetch = 0 : i64, scratch_operands = 0 : i64, tpu.core_type = #tpu.core_type<tc>} {
    %c0 = arith.constant 0 : index
    %c0_0 = arith.constant 0 : index
    %0 = vector.load %arg1[%c0, %c0_0] : memref<16x8xf32, #tpu.memory_space<vmem>>, vector<16x8xf32>
    %c0_1 = arith.constant 0 : index
    %c0_2 = arith.constant 0 : index
    %1 = vector.load %arg3[%c0_1, %c0_2] : memref<15x32xf32, #tpu.memory_space<vmem>>, vector<8x32xf32>
    %cst = arith.constant dense<0.000000e+00> : vector<16x32xf32>
    %2 = tpu.matmul %0, %1, %cst {dimension_numbers = #tpu.dot_dimension_numbers<[1], [0], [0], [1], [0, 0, 1, 1], [], []>} : vector<16x8xf32>, vector<8x32xf32>, vector<16x32xf32> -> vector<16x32xf32>
    %c0_3 = arith.constant 0 : index
    %c0_4 = arith.constant 0 : index
    %3 = vector.load %arg0[%c0_3, %c0_4] : memref<16x6xf32, #tpu.memory_space<vmem>>, vector<16x6xf32>
    %c8 = arith.constant 8 : index
    %c0_5 = arith.constant 0 : index
    %4 = vector.load %arg3[%c8, %c0_5] : memref<15x32xf32, #tpu.memory_space<vmem>>, vector<6x32xf32>
    %cst_6 = arith.constant dense<0.000000e+00> : vector<16x32xf32>
    %5 = tpu.matmul %3, %4, %cst_6 {dimension_numbers = #tpu.dot_dimension_numbers<[1], [0], [0], [1], [0, 0, 1, 1], [], []>} : vector<16x6xf32>, vector<6x32xf32>, vector<16x32xf32> -> vector<16x32xf32>
    %6 = arith.addf %2, %5 : vector<16x32xf32>
    %c14 = arith.constant 14 : index
    %c0_7 = arith.constant 0 : index
    %7 = vector.load %arg3[%c14, %c0_7] : memref<15x32xf32, #tpu.memory_space<vmem>>, vector<1x32xf32>
    %8 = vector.broadcast %7 : vector<1x32xf32> to vector<16x32xf32>
    %9 = arith.addf %6, %8 : vector<16x32xf32>
    %c0_8 = arith.constant 0 : index
    %c0_9 = arith.constant 0 : index
    %10 = vector.load %arg2[%c0_8, %c0_9] : memref<16x6xf32, #tpu.memory_space<vmem>>, vector<16x6xf32>
    %c0_10 = arith.constant 0 : index
    %c0_11 = arith.constant 0 : index
    %11 = vector.load %arg4[%c0_10, %c0_11] : memref<7x32xf32, #tpu.memory_space<vmem>>, vector<6x32xf32>
    %cst_12 = arith.constant dense<0.000000e+00> : vector<16x32xf32>
    %12 = tpu.matmul %10, %11, %cst_12 {dimension_numbers = #tpu.dot_dimension_numbers<[1], [0], [0], [1], [0, 0, 1, 1], [], []>} : vector<16x6xf32>, vector<6x32xf32>, vector<16x32xf32> -> vector<16x32xf32>
    %c6 = arith.constant 6 : index
    %c0_13 = arith.constant 0 : index
    %13 = vector.load %arg4[%c6, %c0_13] : memref<7x32xf32, #tpu.memory_space<vmem>>, vector<1x32xf32>
    %14 = vector.broadcast %13 : vector<1x32xf32> to vector<16x32xf32>
    %15 = arith.addf %12, %14 : vector<16x32xf32>
    %cst_14 = arith.constant 0.000000e+00 : f32
    %16 = vector.broadcast %cst_14 : f32 to vector<16x32xf32>
    %17 = arith.maximumf %9, %16 : vector<16x32xf32>
    %c0_15 = arith.constant 0 : index
    %c0_16 = arith.constant 0 : index
    %18 = vector.load %arg5[%c0_15, %c0_16] : memref<32x32xf32, #tpu.memory_space<vmem>>, vector<16x32xf32>
    tpu.vector_store %arg5[%c0_15, %c0_16], %17 {strides = array<i32>} : memref<32x32xf32, #tpu.memory_space<vmem>>, vector<16x32xf32>,
    %cst_17 = arith.constant 0.000000e+00 : f32
    %19 = vector.broadcast %cst_17 : f32 to vector<16x32xf32>
    %20 = arith.maximumf %15, %19 : vector<16x32xf32>
    %c16 = arith.constant 16 : index
    %c0_18 = arith.constant 0 : index
    %21 = vector.load %arg5[%c16, %c0_18] : memref<32x32xf32, #tpu.memory_space<vmem>>, vector<16x32xf32>
    tpu.vector_store %arg5[%c16, %c0_18], %20 {strides = array<i32>} : memref<32x32xf32, #tpu.memory_space<vmem>>, vector<16x32xf32>,
    return
  }
}

</mosaic_0001>

<llo_original>
// kernel: encoder_forward.1
$region0: #{encoder_forward.1}
  #allocation0 [shape = 'u32[]', space=smem, size = 0x4, offset = 0x4, fixed_abs, tag = 'smem constant byte address 0x4 - core index']
  #allocation1 [shape = 'u32[144,128]{1,0:T(1,128)}', space=vmem, size = 0x12000, scoped, tag = 'internal scratch']
  %s0 = inlined_call_operand.vmem [shape: f32[16,6], index: 0, kind: input, shape index: {}]
  %s1 = inlined_call_operand.vmem [shape: f32[16,8], index: 1, kind: input, shape index: {}]
  %s2 = inlined_call_operand.vmem [shape: f32[16,6], index: 2, kind: input, shape index: {}]
  %s3 = inlined_call_operand.vmem [shape: f32[15,32], index: 3, kind: input, shape index: {}]
  %s4 = inlined_call_operand.vmem [shape: f32[7,32], index: 4, kind: input, shape index: {}]
  %s5 = inlined_call_operand.vmem [shape: f32[32,32], index: 5, kind: output, shape index: {}]
  %s6 = sld [smem:[#allocation0]]
  $region30: #{encoder_forward.1} parent=0
    _
  %s8 = ssub.s32 1, %s6
  %s9 = scalar_select 0, %s8, %s6
  // Predicated region
  $region2: #{encoder_forward.1} parent=0 // pred_check
    _
  $region3: #{encoder_forward.1} parent=0 // pred_check_branch
    %11 = sbr.rel (0) target = $region5
  $region4: #{encoder_forward.1} parent=0 // pred_region
    _
  $region5: #{encoder_forward.1} parent=0 // pred_fallthru
    _
  // Predicated region
  $region6: #{encoder_forward.1} parent=0 // pred_check
    _
  $region7: #{encoder_forward.1} parent=0 // pred_check_branch
    %13 = sbr.rel (0) target = $region9
  $region8: #{encoder_forward.1} parent=0 // pred_region
    _
  $region9: #{encoder_forward.1} parent=0 // pred_fallthru
    _
  // Predicated region
  $region10: #{encoder_forward.1} parent=0 // pred_check
    _
  $region11: #{encoder_forward.1} parent=0 // pred_check_branch
    %15 = sbr.rel (0) target = $region13
  $region12: #{encoder_forward.1} parent=0 // pred_region
    _
  $region13: #{encoder_forward.1} parent=0 // pred_fallthru
    _
  // Predicated region
  $region14: #{encoder_forward.1} parent=0 // pred_check
    _
  $region15: #{encoder_forward.1} parent=0 // pred_check_branch
    %17 = sbr.rel (0) target = $region17
  $region16: #{encoder_forward.1} parent=0 // pred_region
    _
  $region17: #{encoder_forward.1} parent=0 // pred_fallthru
    _
  // Predicated region
  $region18: #{encoder_forward.1} parent=0 // pred_check
    _
  $region19: #{encoder_forward.1} parent=0 // pred_check_branch
    %19 = sbr.rel (0) target = $region21
  $region20: #{encoder_forward.1} parent=0 // pred_region
    _
  $region21: #{encoder_forward.1} parent=0 // pred_fallthru
    _
  %v20 = vld [vmem:[%s1] sm:$0xff]
  %v21 = vld [vmem:[%s1 + $0x8] sm:$0xff]
  %v22 = vld [vmem:[%s3] sm:$0xff]
  %v23 = vld [vmem:[%s0] sm:$0xff]
  %v24 = vld [vmem:[%s0 + $0x8] sm:$0xff]
  %v25 = vld [vmem:[%s3 + $0x8] sm:$0x3f]
  %vm26 = vcmask 48128
  %v28 = vsel %vm26, %v23, 0
  %v31 = vsel %vm26, %v24, 0
  %vm33 = vcmask 1045504
  %v35 = vsel %vm33, %v25, 0
  %37 = vmatprep.subr.mxu0 0.0
  %38 = vmatpush1.msra.mxu0 %v35
  %39 = vmatprep.subr.mxu0 0.0
  %40 = vmatpush1.msra.mxu0 0.0
  %41 = vmatprep.subr.mxu0 0.0
  %42 = vmatpush1.msra.mxu0 0.0
  %43 = vmatprep.subr.mxu0 0.0
  %44 = vmatpush1.msra.mxu0 0.0
  %45 = vmatprep.subr.mxu0 0.0
  %46 = vmatpush1.msra.mxu0 0.0
  %47 = vmatprep.subr.mxu0 0.0
  %48 = vmatpush1.msra.mxu0 0.0
  %49 = vmatprep.subr.mxu0 0.0
  %50 = vmatpush1.msra.mxu0 0.0
  %51 = vmatprep.subr.mxu0 0.0
  %52 = vmatpush1.msra.mxu0 0.0
  %53 = vmatprep.subr.mxu0 0.0
  %54 = vmatpush1.msra.mxu0 0.0
  %55 = vmatprep.subr.mxu0 0.0
  %56 = vmatpush1.msra.mxu0 0.0
  %57 = vmatprep.subr.mxu0 0.0
  %58 = vmatpush1.msra.mxu0 0.0
  %59 = vmatprep.subr.mxu0 0.0
  %60 = vmatpush1.msra.mxu0 0.0
  %61 = vmatprep.subr.mxu0 0.0
  %62 = vmatpush1.msra.mxu0 0.0
  %63 = vmatprep.subr.mxu0 0.0
  %64 = vmatpush1.msra.mxu0 0.0
  %65 = vmatprep.subr.mxu0 0.0
  %66 = vmatpush1.msra.mxu0 0.0
  %67 = vmatprep.subr.mxu0 0.0
  %68 = vmatpush1.msra.mxu0 0.0
  %69 = vmatprep.subr.mxu0 0.0
  %70 = vmatpush1.msra.mxu0 0.0
  %71 = vmatprep.subr.mxu0 0.0
  %72 = vmatpush1.msra.mxu0 0.0
  %73 = vmatprep.subr.mxu0 0.0
  %74 = vmatpush1.msra.mxu0 0.0
  %75 = vmatprep.subr.mxu0 0.0
  %76 = vmatpush1.msra.mxu0 0.0
  %77 = vmatprep.subr.mxu0 0.0
  %78 = vmatpush1.msra.mxu0 0.0
  %79 = vmatprep.subr.mxu0 0.0
  %80 = vmatpush1.msra.mxu0 0.0
  %81 = vmatprep.subr.mxu0 0.0
  %82 = vmatpush1.msra.mxu0 0.0
  %83 = vmatprep.subr.mxu0 0.0
  %84 = vmatpush1.msra.mxu0 0.0
  %85 = vmatprep.subr.mxu0 0.0
  %86 = vmatpush1.msra.mxu0 0.0
  %87 = vmatprep.subr.mxu0 0.0
  %88 = vmatpush1.msra.mxu0 0.0
  %89 = vmatprep.subr.mxu0 0.0
  %90 = vmatpush1.msra.mxu0 0.0
  %91 = vmatprep.subr.mxu0 0.0
  %92 = vmatpush1.msra.mxu0 0.0
  %93 = vmatprep.subr.mxu0 0.0
  %94 = vmatpush1.msra.mxu0 0.0
  %95 = vmatprep.subr.mxu0 0.0
  %96 = vmatpush1.msra.mxu0 0.0
  %97 = vmatprep.subr.mxu0 0.0
  %98 = vmatpush1.msra.mxu0 0.0
  %99 = vmatprep.subr.mxu0 0.0
  %100 = vmatpush1.msra.mxu0 0.0
  %101 = vmatprep.mubr.f32.mxu0 0.0
  %102 = vmatmul.mubr.f32.gmra.mrb[0].mxu0 %v28
  %v103 = vpop.f32.mrb[0].mxu0
  %v104 = vadd.f32 0.0, %v103
  %v105 = vpop.f32.mrb[0].mxu0
  %106 = vmatprep.mubr.f32.mxu0 0.0
  %107 = vmatmul.mubr.f32.gmra.mrb[0].mxu0 %v31
  %v108 = vpop.f32.mrb[0].mxu0
  %v109 = vadd.f32 0.0, %v108
  %v110 = vpop.f32.mrb[0].mxu0
  %111 = vdwg.mxu0
  %vm112 = vcmask 64512
  %v114 = vsel %vm112, %v20, 0
  %v117 = vsel %vm112, %v21, 0
  %119 = vmatprep.subr.mxu0 0.0
  %120 = vmatpush1.msra.mxu0 %v22
  %121 = vmatprep.subr.mxu0 0.0
  %122 = vmatpush1.msra.mxu0 0.0
  %123 = vmatprep.subr.mxu0 0.0
  %124 = vmatpush1.msra.mxu0 0.0
  %125 = vmatprep.subr.mxu0 0.0
  %126 = vmatpush1.msra.mxu0 0.0
  %127 = vmatprep.subr.mxu0 0.0
  %128 = vmatpush1.msra.mxu0 0.0
  %129 = vmatprep.subr.mxu0 0.0
  %130 = vmatpush1.msra.mxu0 0.0
  %131 = vmatprep.subr.mxu0 0.0
  %132 = vmatpush1.msra.mxu0 0.0
  %133 = vmatprep.subr.mxu0 0.0
  %134 = vmatpush1.msra.mxu0 0.0
  %135 = vmatprep.subr.mxu0 0.0
  %136 = vmatpush1.msra.mxu0 0.0
  %137 = vmatprep.subr.mxu0 0.0
  %138 = vmatpush1.msra.mxu0 0.0
  %139 = vmatprep.subr.mxu0 0.0
  %140 = vmatpush1.msra.mxu0 0.0
  %141 = vmatprep.subr.mxu0 0.0
  %142 = vmatpush1.msra.mxu0 0.0
  %143 = vmatprep.subr.mxu0 0.0
  %144 = vmatpush1.msra.mxu0 0.0
  %145 = vmatprep.subr.mxu0 0.0
  %146 = vmatpush1.msra.mxu0 0.0
  %147 = vmatprep.subr.mxu0 0.0
  %148 = vmatpush1.msra.mxu0 0.0
  %149 = vmatprep.subr.mxu0 0.0
  %150 = vmatpush1.msra.mxu0 0.0
  %151 = vmatprep.subr.mxu0 0.0
  %152 = vmatpush1.msra.mxu0 0.0
  %153 = vmatprep.subr.mxu0 0.0
  %154 = vmatpush1.msra.mxu0 0.0
  %155 = vmatprep.subr.mxu0 0.0
  %156 = vmatpush1.msra.mxu0 0.0
  %157 = vmatprep.subr.mxu0 0.0
  %158 = vmatpush1.msra.mxu0 0.0
  %159 = vmatprep.subr.mxu0 0.0
  %160 = vmatpush1.msra.mxu0 0.0
  %161 = vmatprep.subr.mxu0 0.0
  %162 = vmatpush1.msra.mxu0 0.0
  %163 = vmatprep.subr.mxu0 0.0
  %164 = vmatpush1.msra.mxu0 0.0
  %165 = vmatprep.subr.mxu0 0.0
  %166 = vmatpush1.msra.mxu0 0.0
  %167 = vmatprep.subr.mxu0 0.0
  %168 = vmatpush1.msra.mxu0 0.0
  %169 = vmatprep.subr.mxu0 0.0
  %170 = vmatpush1.msra.mxu0 0.0
  %171 = vmatprep.subr.mxu0 0.0
  %172 = vmatpush1.msra.mxu0 0.0
  %173 = vmatprep.subr.mxu0 0.0
  %174 = vmatpush1.msra.mxu0 0.0
  %175 = vmatprep.subr.mxu0 0.0
  %176 = vmatpush1.msra.mxu0 0.0
  %177 = vmatprep.subr.mxu0 0.0
  %178 = vmatpush1.msra.mxu0 0.0
  %179 = vmatprep.subr.mxu0 0.0
  %180 = vmatpush1.msra.mxu0 0.0
  %181 = vmatprep.subr.mxu0 0.0
  %182 = vmatpush1.msra.mxu0 0.0
  %183 = vmatprep.mubr.f32.mxu0 0.0
  %184 = vmatmul.mubr.f32.gmra.mrb[0].mxu0 %v114
  %v185 = vpop.f32.mrb[0].mxu0
  %v186 = vadd.f32 %v104, %v185
  %v187 = vpop.f32.mrb[0].mxu0
  %188 = vmatprep.mubr.f32.mxu0 0.0
  %189 = vmatmul.mubr.f32.gmra.mrb[0].mxu0 %v117
  %v190 = vpop.f32.mrb[0].mxu0
  %v191 = vadd.f32 %v109, %v190
  %v192 = vpop.f32.mrb[0].mxu0
  %193 = vdwg.mxu0
  %v194 = vld [vmem:[%s3 + $0xe] sm:$0x1]
  %v195 = vlaneseq
  %v196 = vshrl.u32 %v195, 7
  %v197 = vsub.s32 0, %v196
  %v198 = vrot.slane %v194, %v197
  %v199 = vadd.f32 %v186, %v198
  %v200 = vadd.f32 %v191, %v198
  %v201 = vld [vmem:[%s2] sm:$0xff]
  %v202 = vld [vmem:[%s2 + $0x8] sm:$0xff]
  %v203 = vld [vmem:[%s4] sm:$0x3f]
  %v204 = vld [vmem:[%s4 + $0x6] sm:$0x1]
  %v205 = vlaneseq
  %v206 = vshrl.u32 %v205, 7
  %v207 = vsub.s32 0, %v206
  %v208 = vrot.slane %v204, %v207
  %v210 = vsel %vm26, %v201, 0
  %v213 = vsel %vm26, %v202, 0
  %v216 = vsel %vm33, %v203, 0
  %218 = vmatprep.subr.mxu0 0.0
  %219 = vmatpush1.msra.mxu0 %v216
  %220 = vmatprep.subr.mxu0 0.0
  %221 = vmatpush1.msra.mxu0 0.0
  %222 = vmatprep.subr.mxu0 0.0
  %223 = vmatpush1.msra.mxu0 0.0
  %224 = vmatprep.subr.mxu0 0.0
  %225 = vmatpush1.msra.mxu0 0.0
  %226 = vmatprep.subr.mxu0 0.0
  %227 = vmatpush1.msra.mxu0 0.0
  %228 = vmatprep.subr.mxu0 0.0
  %229 = vmatpush1.msra.mxu0 0.0
  %230 = vmatprep.subr.mxu0 0.0
  %231 = vmatpush1.msra.mxu0 0.0
  %232 = vmatprep.subr.mxu0 0.0
  %233 = vmatpush1.msra.mxu0 0.0
  %234 = vmatprep.subr.mxu0 0.0
  %235 = vmatpush1.msra.mxu0 0.0
  %236 = vmatprep.subr.mxu0 0.0
  %237 = vmatpush1.msra.mxu0 0.0
  %238 = vmatprep.subr.mxu0 0.0
  %239 = vmatpush1.msra.mxu0 0.0
  %240 = vmatprep.subr.mxu0 0.0
  %241 = vmatpush1.msra.mxu0 0.0
  %242 = vmatprep.subr.mxu0 0.0
  %243 = vmatpush1.msra.mxu0 0.0
  %244 = vmatprep.subr.mxu0 0.0
  %245 = vmatpush1.msra.mxu0 0.0
  %246 = vmatprep.subr.mxu0 0.0
  %247 = vmatpush1.msra.mxu0 0.0
  %248 = vmatprep.subr.mxu0 0.0
  %249 = vmatpush1.msra.mxu0 0.0
  %250 = vmatprep.subr.mxu0 0.0
  %251 = vmatpush1.msra.mxu0 0.0
  %252 = vmatprep.subr.mxu0 0.0
  %253 = vmatpush1.msra.mxu0 0.0
  %254 = vmatprep.subr.mxu0 0.0
  %255 = vmatpush1.msra.mxu0 0.0
  %256 = vmatprep.subr.mxu0 0.0
  %257 = vmatpush1.msra.mxu0 0.0
  %258 = vmatprep.subr.mxu0 0.0
  %259 = vmatpush1.msra.mxu0 0.0
  %260 = vmatprep.subr.mxu0 0.0
  %261 = vmatpush1.msra.mxu0 0.0
  %262 = vmatprep.subr.mxu0 0.0
  %263 = vmatpush1.msra.mxu0 0.0
  %264 = vmatprep.subr.mxu0 0.0
  %265 = vmatpush1.msra.mxu0 0.0
  %266 = vmatprep.subr.mxu0 0.0
  %267 = vmatpush1.msra.mxu0 0.0
  %268 = vmatprep.subr.mxu0 0.0
  %269 = vmatpush1.msra.mxu0 0.0
  %270 = vmatprep.subr.mxu0 0.0
  %271 = vmatpush1.msra.mxu0 0.0
  %272 = vmatprep.subr.mxu0 0.0
  %273 = vmatpush1.msra.mxu0 0.0
  %274 = vmatprep.subr.mxu0 0.0
  %275 = vmatpush1.msra.mxu0 0.0
  %276 = vmatprep.subr.mxu0 0.0
  %277 = vmatpush1.msra.mxu0 0.0
  %278 = vmatprep.subr.mxu0 0.0
  %279 = vmatpush1.msra.mxu0 0.0
  %280 = vmatprep.subr.mxu0 0.0
  %281 = vmatpush1.msra.mxu0 0.0
  %282 = vmatprep.mubr.f32.mxu0 0.0
  %283 = vmatmul.mubr.f32.gmra.mrb[0].mxu0 %v210
  %v284 = vpop.f32.mrb[0].mxu0
  %v285 = vadd.f32 %v208, %v284
  %v286 = vpop.f32.mrb[0].mxu0
  %287 = vmatprep.mubr.f32.mxu0 0.0
  %288 = vmatmul.mubr.f32.gmra.mrb[0].mxu0 %v213
  %v289 = vpop.f32.mrb[0].mxu0
  %v290 = vadd.f32 %v208, %v289
  %v291 = vpop.f32.mrb[0].mxu0
  %292 = vdwg.mxu0
  %v293 = vmax.f32 %v199, 0.0
  %v294 = vmax.f32 %v200, 0.0
  %vm295 = vcmask 261120
  %296 = vst.msk [vmem:[%s5] sm:$0xff] %vm295, %v293
  %297 = vst.msk [vmem:[%s5 + $0x8] sm:$0xff] %vm295, %v294
  %v298 = vmax.f32 %v285, 0.0
  %v299 = vmax.f32 %v290, 0.0
  %300 = vst.msk [vmem:[%s5 + $0x10] sm:$0xff] %vm295, %v298
  %301 = vst.msk [vmem:[%s5 + $0x18] sm:$0xff] %vm295, %v299
  // Predicated region
  $region22: #{encoder_forward.1} parent=0 // pred_check
    _
  $region23: #{encoder_forward.1} parent=0 // pred_check_branch
    %303 = sbr.rel (0) target = $region25
  $region24: #{encoder_forward.1} parent=0 // pred_region
    _
  $region25: #{encoder_forward.1} parent=0 // pred_fallthru
    _
  // Predicated region
  $region26: #{encoder_forward.1} parent=0 // pred_check
    _
  $region27: #{encoder_forward.1} parent=0 // pred_check_branch
    %305 = sbr.rel (0) target = $region29
  $region28: #{encoder_forward.1} parent=0 // pred_region
    _
  $region29: #{encoder_forward.1} parent=0 // pred_fallthru
    _

</llo_original>
